<compile_context>
chip_gen: v7x
topology: tpu7x:2x2x1
jax: 0.10.0
libtpu: 0.0.40
codegen_flags: <defaults>
</compile_context>

<pallas_src>
import functools

import jax
import jax.numpy as jnp
from jax.experimental import pallas as pl
from jax.experimental.pallas import tpu as pltpu

HIDDEN = 32     # hidden width from the PyTorch module
LANE = 128      # TPU lane width: pad feature dims to this
SUBLANE = 8     # f32 sublane width: batch tile must be a multiple of this


def _round_up(x, m):
    return (x + m - 1) // m * m


def _pad2(a, rows, cols):
    return jnp.pad(a, ((0, rows - a.shape[0]), (0, cols - a.shape[1])))


def _mlp_kernel(x_ref, w1_ref, b1_ref, w2_ref, b2_ref, w3_ref, b3_ref,
                w4_ref, b4_ref, o_ref):
    """One batch tile through the whole MLP. bf16 MXU matmuls, f32 epilogues."""
    # l1 + hardtanh
    h = jnp.dot(x_ref[...], w1_ref[...], preferred_element_type=jnp.float32)
    h = jnp.clip(h + b1_ref[...], -1.0, 1.0)
    # l2 + hardtanh
    h = jnp.dot(h.astype(w2_ref.dtype), w2_ref[...],
                preferred_element_type=jnp.float32)
    h = jnp.clip(h + b2_ref[...], -1.0, 1.0)
    # l3 + hardtanh
    h = jnp.dot(h.astype(w3_ref.dtype), w3_ref[...],
                preferred_element_type=jnp.float32)
    h = jnp.clip(h + b3_ref[...], -1.0, 1.0)
    # l4 (no activation)
    y = jnp.dot(h.astype(w4_ref.dtype), w4_ref[...],
                preferred_element_type=jnp.float32)
    o_ref[...] = (y + b4_ref[...]).astype(o_ref.dtype)


def init_params(key, input_size):
    """PyTorch-style nn.Linear init, weights stored (in, out)."""
    dims = [input_size, HIDDEN, HIDDEN, HIDDEN, 1]
    keys = jax.random.split(key, 2 * (len(dims) - 1))
    params = {}
    for idx, (fan_in, fan_out) in enumerate(zip(dims[:-1], dims[1:]), start=1):
        bound = 1.0 / (fan_in ** 0.5)
        params[f"w{idx}"] = jax.random.uniform(
            keys[2 * (idx - 1)], (fan_in, fan_out), jnp.float32, -bound, bound)
        params[f"b{idx}"] = jax.random.uniform(
            keys[2 * (idx - 1) + 1], (1, fan_out), jnp.float32, -bound, bound)
    return params


def reference_forward(x, params):
    """Pure-JAX f32 reference matching the PyTorch forward."""
    h = jnp.clip(x @ params["w1"] + params["b1"], -1.0, 1.0)
    h = jnp.clip(h @ params["w2"] + params["b2"], -1.0, 1.0)
    h = jnp.clip(h @ params["w3"] + params["b3"], -1.0, 1.0)
    return h @ params["w4"] + params["b4"]


def neural_net_forward(x, params, *, tm=256):
    B, K0 = x.shape
    K0p = _round_up(K0, LANE)        # padded input features
    Hp = _round_up(HIDDEN, LANE)     # padded hidden width  (32 -> 128)
    Np = _round_up(1, LANE)          # padded output width  (1  -> 128)

    tm = min(tm, _round_up(B, SUBLANE))   # batch tile (multiple of 8)
    Bp = _round_up(B, tm)

    # Pad + cast matmul operands to bf16 (MXU inputs); biases stay f32.
    x_p = _pad2(x, Bp, K0p).astype(jnp.bfloat16)
    w1p = _pad2(params["w1"], K0p, Hp).astype(jnp.bfloat16)
    w2p = _pad2(params["w2"], Hp, Hp).astype(jnp.bfloat16)
    w3p = _pad2(params["w3"], Hp, Hp).astype(jnp.bfloat16)
    w4p = _pad2(params["w4"], Hp, Np).astype(jnp.bfloat16)
    b1p = _pad2(params["b1"], 1, Hp)
    b2p = _pad2(params["b2"], 1, Hp)
    b3p = _pad2(params["b3"], 1, Hp)
    b4p = _pad2(params["b4"], 1, Np)

    grid = (Bp // tm,)
    flops = 2 * Bp * (K0p * Hp + 2 * Hp * Hp + Hp * Np)
    bytes_accessed = (
        2 * x_p.size                                      # bf16 activations in
        + 2 * (w1p.size + w2p.size + w3p.size + w4p.size)  # bf16 weights (once)
        + 4 * (b1p.size + b2p.size + b3p.size + b4p.size)  # f32 biases
        + 4 * Bp * Np)                                     # f32 output

    resident = lambda i: (0, 0)   # weights / biases: one block, VMEM-resident

    out_p = pl.pallas_call(
        _mlp_kernel,
        out_shape=jax.ShapeDtypeStruct((Bp, Np), jnp.float32),
        grid_spec=pltpu.PrefetchScalarGridSpec(
            num_scalar_prefetch=0,
            grid=grid,
            in_specs=[
                pl.BlockSpec((tm, K0p), lambda i: (i, 0)),   # x batch tile
                pl.BlockSpec((K0p, Hp), resident),           # W1
                pl.BlockSpec((1, Hp), resident),             # b1
                pl.BlockSpec((Hp, Hp), resident),            # W2
                pl.BlockSpec((1, Hp), resident),             # b2
                pl.BlockSpec((Hp, Hp), resident),            # W3
                pl.BlockSpec((1, Hp), resident),             # b3
                pl.BlockSpec((Hp, Np), resident),            # W4
                pl.BlockSpec((1, Np), resident),             # b4
            ],
            out_specs=pl.BlockSpec((tm, Np), lambda i: (i, 0)),
        ),
        compiler_params=pltpu.CompilerParams(
            dimension_semantics=("parallel",),   # batch tiles -> 2 TCs on v7x
            vmem_limit_bytes=32 * 1024 * 1024,
        ),
        cost_estimate=pl.CostEstimate(
            flops=flops, transcendentals=0, bytes_accessed=bytes_accessed),
    )(x_p, w1p, b1p, w2p, b2p, w3p, b3p, w4p, b4p)

    return out_p[:B, :1]   # strip batch/feature padding -> (B, 1)


if __name__ == "__main__":
    input_size = 16
    batch = 20

    key = jax.random.PRNGKey(0)
    kx, kp = jax.random.split(key)
    x = jax.random.normal(kx, (batch, input_size), dtype=jnp.float32)
    params = init_params(kp, input_size)

    # Small tm so the tiny example still exercises a multi-tile batch grid.
    fwd = jax.jit(functools.partial(neural_net_forward, tm=8))
    y = jax.block_until_ready(fwd(x, params))

    assert y.shape == (batch, 1), y.shape
    y_ref = reference_forward(x, params)
    # bf16 matmul inputs + f32 accumulation -> loose-but-tight-enough check.
    assert jnp.allclose(y, y_ref, atol=5e-2, rtol=5e-2), (
        float(jnp.max(jnp.abs(y - y_ref))))

    print("KERNEL_OK")
</pallas_src>

<mosaic_0001>
module attributes {stable_mosaic.version = 11 : i64} {
  func.func @_mlp_kernel(%arg0: i32, %arg1: memref<8x128xbf16, #tpu.memory_space<vmem>>, %arg2: memref<128x128xbf16, #tpu.memory_space<vmem>>, %arg3: memref<1x128xf32, #tpu.memory_space<vmem>>, %arg4: memref<128x128xbf16, #tpu.memory_space<vmem>>, %arg5: memref<1x128xf32, #tpu.memory_space<vmem>>, %arg6: memref<128x128xbf16, #tpu.memory_space<vmem>>, %arg7: memref<1x128xf32, #tpu.memory_space<vmem>>, %arg8: memref<128x128xbf16, #tpu.memory_space<vmem>>, %arg9: memref<1x128xf32, #tpu.memory_space<vmem>>, %arg10: memref<8x128xf32, #tpu.memory_space<vmem>>) attributes {dimension_semantics = [#tpu.dimension_semantics<parallel>], iteration_bounds = array<i64: 3>, scalar_prefetch = 0 : i64, scratch_operands = 0 : i64, tpu.core_type = #tpu.core_type<tc>, window_params = [{transform_indices = @transform_0, window_bounds = array<i64: 8, 128>}, {pipeline_mode = #tpu.pipeline_mode<synchronous>, transform_indices = @transform_1, window_bounds = array<i64: 128, 128>}, {pipeline_mode = #tpu.pipeline_mode<synchronous>, transform_indices = @transform_2, window_bounds = array<i64: 1, 128>}, {pipeline_mode = #tpu.pipeline_mode<synchronous>, transform_indices = @transform_3, window_bounds = array<i64: 128, 128>}, {pipeline_mode = #tpu.pipeline_mode<synchronous>, transform_indices = @transform_4, window_bounds = array<i64: 1, 128>}, {pipeline_mode = #tpu.pipeline_mode<synchronous>, transform_indices = @transform_5, window_bounds = array<i64: 128, 128>}, {pipeline_mode = #tpu.pipeline_mode<synchronous>, transform_indices = @transform_6, window_bounds = array<i64: 1, 128>}, {pipeline_mode = #tpu.pipeline_mode<synchronous>, transform_indices = @transform_7, window_bounds = array<i64: 128, 128>}, {pipeline_mode = #tpu.pipeline_mode<synchronous>, transform_indices = @transform_8, window_bounds = array<i64: 1, 128>}, {transform_indices = @transform_9, window_bounds = array<i64: 8, 128>}]} {
    %c0 = arith.constant 0 : index
    %c0_0 = arith.constant 0 : index
    %0 = vector.load %arg1[%c0, %c0_0] : memref<8x128xbf16, #tpu.memory_space<vmem>>, vector<8x128xbf16>
    %c0_1 = arith.constant 0 : index
    %c0_2 = arith.constant 0 : index
    %1 = vector.load %arg2[%c0_1, %c0_2] : memref<128x128xbf16, #tpu.memory_space<vmem>>, vector<128x128xbf16>
    %cst = arith.constant dense<0.000000e+00> : vector<8x128xf32>
    %2 = tpu.matmul %0, %1, %cst {dimension_numbers = #tpu.dot_dimension_numbers<[1], [0], [0], [1], [0, 0, 1, 1], [], []>} : vector<8x128xbf16>, vector<128x128xbf16>, vector<8x128xf32> -> vector<8x128xf32>
    %c0_3 = arith.constant 0 : index
    %c0_4 = arith.constant 0 : index
    %3 = vector.load %arg3[%c0_3, %c0_4] : memref<1x128xf32, #tpu.memory_space<vmem>>, vector<1x128xf32>
    %4 = vector.broadcast %3 : vector<1x128xf32> to vector<8x128xf32>
    %5 = arith.addf %2, %4 : vector<8x128xf32>
    %cst_5 = arith.constant -1.000000e+00 : f32
    %cst_6 = arith.constant 1.000000e+00 : f32
    %6 = vector.broadcast %cst_5 : f32 to vector<8x128xf32>
    %7 = arith.maximumf %6, %5 : vector<8x128xf32>
    %8 = vector.broadcast %cst_6 : f32 to vector<8x128xf32>
    %9 = arith.minimumf %8, %7 : vector<8x128xf32>
    %10 = arith.truncf %9 : vector<8x128xf32> to vector<8x128xbf16>
    %c0_7 = arith.constant 0 : index
    %c0_8 = arith.constant 0 : index
    %11 = vector.load %arg4[%c0_7, %c0_8] : memref<128x128xbf16, #tpu.memory_space<vmem>>, vector<128x128xbf16>
    %cst_9 = arith.constant dense<0.000000e+00> : vector<8x128xf32>
    %12 = tpu.matmul %10, %11, %cst_9 {dimension_numbers = #tpu.dot_dimension_numbers<[1], [0], [0], [1], [0, 0, 1, 1], [], []>} : vector<8x128xbf16>, vector<128x128xbf16>, vector<8x128xf32> -> vector<8x128xf32>
    %c0_10 = arith.constant 0 : index
    %c0_11 = arith.constant 0 : index
    %13 = vector.load %arg5[%c0_10, %c0_11] : memref<1x128xf32, #tpu.memory_space<vmem>>, vector<1x128xf32>
    %14 = vector.broadcast %13 : vector<1x128xf32> to vector<8x128xf32>
    %15 = arith.addf %12, %14 : vector<8x128xf32>
    %cst_12 = arith.constant -1.000000e+00 : f32
    %cst_13 = arith.constant 1.000000e+00 : f32
    %16 = vector.broadcast %cst_12 : f32 to vector<8x128xf32>
    %17 = arith.maximumf %16, %15 : vector<8x128xf32>
    %18 = vector.broadcast %cst_13 : f32 to vector<8x128xf32>
    %19 = arith.minimumf %18, %17 : vector<8x128xf32>
    %20 = arith.truncf %19 : vector<8x128xf32> to vector<8x128xbf16>
    %c0_14 = arith.constant 0 : index
    %c0_15 = arith.constant 0 : index
    %21 = vector.load %arg6[%c0_14, %c0_15] : memref<128x128xbf16, #tpu.memory_space<vmem>>, vector<128x128xbf16>
    %cst_16 = arith.constant dense<0.000000e+00> : vector<8x128xf32>
    %22 = tpu.matmul %20, %21, %cst_16 {dimension_numbers = #tpu.dot_dimension_numbers<[1], [0], [0], [1], [0, 0, 1, 1], [], []>} : vector<8x128xbf16>, vector<128x128xbf16>, vector<8x128xf32> -> vector<8x128xf32>
    %c0_17 = arith.constant 0 : index
    %c0_18 = arith.constant 0 : index
    %23 = vector.load %arg7[%c0_17, %c0_18] : memref<1x128xf32, #tpu.memory_space<vmem>>, vector<1x128xf32>
    %24 = vector.broadcast %23 : vector<1x128xf32> to vector<8x128xf32>
    %25 = arith.addf %22, %24 : vector<8x128xf32>
    %cst_19 = arith.constant -1.000000e+00 : f32
    %cst_20 = arith.constant 1.000000e+00 : f32
    %26 = vector.broadcast %cst_19 : f32 to vector<8x128xf32>
    %27 = arith.maximumf %26, %25 : vector<8x128xf32>
    %28 = vector.broadcast %cst_20 : f32 to vector<8x128xf32>
    %29 = arith.minimumf %28, %27 : vector<8x128xf32>
    %30 = arith.truncf %29 : vector<8x128xf32> to vector<8x128xbf16>
    %c0_21 = arith.constant 0 : index
    %c0_22 = arith.constant 0 : index
    %31 = vector.load %arg8[%c0_21, %c0_22] : memref<128x128xbf16, #tpu.memory_space<vmem>>, vector<128x128xbf16>
    %cst_23 = arith.constant dense<0.000000e+00> : vector<8x128xf32>
    %32 = tpu.matmul %30, %31, %cst_23 {dimension_numbers = #tpu.dot_dimension_numbers<[1], [0], [0], [1], [0, 0, 1, 1], [], []>} : vector<8x128xbf16>, vector<128x128xbf16>, vector<8x128xf32> -> vector<8x128xf32>
    %c0_24 = arith.constant 0 : index
    %c0_25 = arith.constant 0 : index
    %33 = vector.load %arg9[%c0_24, %c0_25] : memref<1x128xf32, #tpu.memory_space<vmem>>, vector<1x128xf32>
    %34 = vector.broadcast %33 : vector<1x128xf32> to vector<8x128xf32>
    %35 = arith.addf %32, %34 : vector<8x128xf32>
    %c0_26 = arith.constant 0 : index
    %c0_27 = arith.constant 0 : index
    %36 = vector.load %arg10[%c0_26, %c0_27] : memref<8x128xf32, #tpu.memory_space<vmem>>, vector<8x128xf32>
    tpu.vector_store %arg10[%c0_26, %c0_27], %35 {strides = array<i32>} : memref<8x128xf32, #tpu.memory_space<vmem>>, vector<8x128xf32>,
    return
  }
  func.func @transform_0(%arg0: i32) -> (i32, i32) {
    %c0_i32 = arith.constant 0 : i32
    %c0_i32_0 = arith.constant 0 : i32
    return %arg0, %c0_i32 : i32, i32
  }
  func.func @transform_1(%arg0: i32) -> (i32, i32) {
    %c0_i32 = arith.constant 0 : i32
    %c0_i32_0 = arith.constant 0 : i32
    %c0_i32_1 = arith.constant 0 : i32
    return %c0_i32, %c0_i32_0 : i32, i32
  }
  func.func @transform_2(%arg0: i32) -> (i32, i32) {
    %c0_i32 = arith.constant 0 : i32
    %c0_i32_0 = arith.constant 0 : i32
    %c0_i32_1 = arith.constant 0 : i32
    return %c0_i32, %c0_i32_0 : i32, i32
  }
  func.func @transform_3(%arg0: i32) -> (i32, i32) {
    %c0_i32 = arith.constant 0 : i32
    %c0_i32_0 = arith.constant 0 : i32
    %c0_i32_1 = arith.constant 0 : i32
    return %c0_i32, %c0_i32_0 : i32, i32
  }
  func.func @transform_4(%arg0: i32) -> (i32, i32) {
    %c0_i32 = arith.constant 0 : i32
    %c0_i32_0 = arith.constant 0 : i32
    %c0_i32_1 = arith.constant 0 : i32
    return %c0_i32, %c0_i32_0 : i32, i32
  }
  func.func @transform_5(%arg0: i32) -> (i32, i32) {
    %c0_i32 = arith.constant 0 : i32
    %c0_i32_0 = arith.constant 0 : i32
    %c0_i32_1 = arith.constant 0 : i32
    return %c0_i32, %c0_i32_0 : i32, i32
  }
  func.func @transform_6(%arg0: i32) -> (i32, i32) {
    %c0_i32 = arith.constant 0 : i32
    %c0_i32_0 = arith.constant 0 : i32
    %c0_i32_1 = arith.constant 0 : i32
    return %c0_i32, %c0_i32_0 : i32, i32
  }
  func.func @transform_7(%arg0: i32) -> (i32, i32) {
    %c0_i32 = arith.constant 0 : i32
    %c0_i32_0 = arith.constant 0 : i32
    %c0_i32_1 = arith.constant 0 : i32
    return %c0_i32, %c0_i32_0 : i32, i32
  }
  func.func @transform_8(%arg0: i32) -> (i32, i32) {
    %c0_i32 = arith.constant 0 : i32
    %c0_i32_0 = arith.constant 0 : i32
    %c0_i32_1 = arith.constant 0 : i32
    return %c0_i32, %c0_i32_0 : i32, i32
  }
  func.func @transform_9(%arg0: i32) -> (i32, i32) {
    %c0_i32 = arith.constant 0 : i32
    %c0_i32_0 = arith.constant 0 : i32
    return %arg0, %c0_i32 : i32, i32
  }
}

</mosaic_0001>

<llo_original>
// kernel: neural_net_forward.1
$region0: #{neural_net_forward.1}
  #allocation0 [shape = 'u32[]', space=smem, size = 0x4, offset = 0x4, fixed_abs, tag = 'smem constant byte address 0x4 - core index']
  #allocation1 [shape = 'u32[144,128]{1,0:T(1,128)}', space=vmem, size = 0x12000, scoped, tag = 'internal scratch']
  %s0 = inlined_call_operand.vmem [shape: bf16[24,128], index: 0, kind: input, shape index: {}]
  %s1 = inlined_call_operand.vmem [shape: bf16[128,128], index: 1, kind: input, shape index: {}]
  %s2 = inlined_call_operand.vmem [shape: f32[1,128], index: 2, kind: input, shape index: {}]
  %s3 = inlined_call_operand.vmem [shape: bf16[128,128], index: 3, kind: input, shape index: {}]
  %s4 = inlined_call_operand.vmem [shape: f32[1,128], index: 4, kind: input, shape index: {}]
  %s5 = inlined_call_operand.vmem [shape: bf16[128,128], index: 5, kind: input, shape index: {}]
  %s6 = inlined_call_operand.vmem [shape: f32[1,128], index: 6, kind: input, shape index: {}]
  %s7 = inlined_call_operand.vmem [shape: bf16[128,128], index: 7, kind: input, shape index: {}]
  %s8 = inlined_call_operand.vmem [shape: f32[1,128], index: 8, kind: input, shape index: {}]
  %s9 = inlined_call_operand.vmem [shape: f32[24,128], index: 9, kind: output, shape index: {}]
  %s10 = sld [smem:[#allocation0]]
  $region69: #{neural_net_forward.1} parent=0
    _
  %s12 = ssub.s32 1, %s10
  %s13 = scalar_select 0, %s12, %s10
  loop: start=0, step=1, limit=5
  $region2: #{neural_net_forward.1} parent=0 // loop_pre_header
    _
  $region3: #{neural_net_forward.1} parent=0 // loop_header
    %s15 = sphi 0, %s19
    %p16 = scmp.ge.s32.totalorder %s15, 5
    %s25 = sphi 0, %s27
    %s28 = sphi 0, %s25
    %s29 = sphi 0, %s28
    %s45 = sphi 0, %s29
    %s49 = sphi 0, %s49
    %s51 = sphi 0, %s49
    %s52 = sphi 0, %s51
    %s66 = sphi 0, %s52
    %s70 = sphi 0, %s70
    %s72 = sphi 0, %s70
    %s73 = sphi 0, %s72
    %s87 = sphi 0, %s73
    %s91 = sphi 0, %s91
    %s93 = sphi 0, %s91
    %s94 = sphi 0, %s93
    %s108 = sphi 0, %s94
    %s112 = sphi 0, %s112
    %s114 = sphi 0, %s112
    %s115 = sphi 0, %s114
    %s129 = sphi 0, %s115
    %s133 = sphi 0, %s133
    %s135 = sphi 0, %s133
    %s136 = sphi 0, %s135
    %s150 = sphi 0, %s136
    %s154 = sphi 0, %s154
    %s156 = sphi 0, %s154
    %s157 = sphi 0, %s156
    %s171 = sphi 0, %s157
    %s175 = sphi 0, %s175
    %s177 = sphi 0, %s175
    %s178 = sphi 0, %s177
    %s192 = sphi 0, %s178
    %s196 = sphi 0, %s196
    %s198 = sphi 0, %s196
    %s199 = sphi 0, %s198
    %s213 = sphi 0, %s199
    %s219 = sphi 0, %s221
    %s222 = sphi 0, %s219
    %s223 = sphi 0, %s222
    %s239 = sphi 0, %s223
  $region4: #{neural_net_forward.1} parent=0 // loop_header_branch
    %18 = sbr.rel (%p16) target = $region8
  $region5: #{neural_net_forward.1} parent=0 // loop_body
    %s20 = ssub.s32 %s15, 1
    %s21 = ssub.s32 %s15, 2
    %s22 = sadd.s32 %s15, 1
    %s23 = ssub.s32 %s15, %s22
    %p24 = scmp.eq.s32.totalorder %s23, 0
    %s26 = sadd.s32 %s25, 1
    %s27 = scalar_select %p24, %s25, %s26
    %p30 = pneg %p24
    %p31 = scmp.eq.s32.totalorder %s15, 2
    %p32 = por %p30, %p31
    %p33 = scmp.ne.s32.totalorder %s25, %s28
    %p34 = scmp.eq.s32.totalorder %s15, 0
    %p35 = por %p33, %p34
    %p36 = scmp.ne.s32.totalorder %s25, %s28
    %p37 = scmp.eq.s32.totalorder %s20, 2
    %p38 = por %p36, %p37
    %p39 = scmp.ne.s32.totalorder %s28, %s29
    %p40 = scmp.eq.s32.totalorder %s20, 0
    %p41 = por %p39, %p40
    %p42 = scmp.ne.s32.totalorder %s28, %s29
    %p43 = scmp.eq.s32.totalorder %s21, 2
    %p44 = por %p42, %p43
    %p46 = scmp.ne.s32.totalorder %s29, %s45
    %p47 = scmp.eq.s32.totalorder %s21, 0
    %p48 = por %p46, %p47
    %s50 = sadd.s32 %s49, 1
    %p53 = scmp.eq.s32.totalorder %s15, 2
    %p54 = scmp.ne.s32.totalorder %s49, %s51
    %p55 = scmp.eq.s32.totalorder %s15, 0
    %p56 = por %p54, %p55
    %p57 = scmp.ne.s32.totalorder %s49, %s51
    %p58 = scmp.eq.s32.totalorder %s20, 2
    %p59 = por %p57, %p58
    %p60 = scmp.ne.s32.totalorder %s51, %s52
    %p61 = scmp.eq.s32.totalorder %s20, 0
    %p62 = por %p60, %p61
    %p63 = scmp.ne.s32.totalorder %s51, %s52
    %p64 = scmp.eq.s32.totalorder %s21, 2
    %p65 = por %p63, %p64
    %p67 = scmp.ne.s32.totalorder %s52, %s66
    %p68 = scmp.eq.s32.totalorder %s21, 0
    %p69 = por %p67, %p68
    %s71 = sadd.s32 %s70, 1
    %p74 = scmp.eq.s32.totalorder %s15, 2
    %p75 = scmp.ne.s32.totalorder %s70, %s72
    %p76 = scmp.eq.s32.totalorder %s15, 0
    %p77 = por %p75, %p76
    %p78 = scmp.ne.s32.totalorder %s70, %s72
    %p79 = scmp.eq.s32.totalorder %s20, 2
    %p80 = por %p78, %p79
    %p81 = scmp.ne.s32.totalorder %s72, %s73
    %p82 = scmp.eq.s32.totalorder %s20, 0
    %p83 = por %p81, %p82
    %p84 = scmp.ne.s32.totalorder %s72, %s73
    %p85 = scmp.eq.s32.totalorder %s21, 2
    %p86 = por %p84, %p85
    %p88 = scmp.ne.s32.totalorder %s73, %s87
    %p89 = scmp.eq.s32.totalorder %s21, 0
    %p90 = por %p88, %p89
    %s92 = sadd.s32 %s91, 1
    %p95 = scmp.eq.s32.totalorder %s15, 2
    %p96 = scmp.ne.s32.totalorder %s91, %s93
    %p97 = scmp.eq.s32.totalorder %s15, 0
    %p98 = por %p96, %p97
    %p99 = scmp.ne.s32.totalorder %s91, %s93
    %p100 = scmp.eq.s32.totalorder %s20, 2
    %p101 = por %p99, %p100
    %p102 = scmp.ne.s32.totalorder %s93, %s94
    %p103 = scmp.eq.s32.totalorder %s20, 0
    %p104 = por %p102, %p103
    %p105 = scmp.ne.s32.totalorder %s93, %s94
    %p106 = scmp.eq.s32.totalorder %s21, 2
    %p107 = por %p105, %p106
    %p109 = scmp.ne.s32.totalorder %s94, %s108
    %p110 = scmp.eq.s32.totalorder %s21, 0
    %p111 = por %p109, %p110
    %s113 = sadd.s32 %s112, 1
    %p116 = scmp.eq.s32.totalorder %s15, 2
    %p117 = scmp.ne.s32.totalorder %s112, %s114
    %p118 = scmp.eq.s32.totalorder %s15, 0
    %p119 = por %p117, %p118
    %p120 = scmp.ne.s32.totalorder %s112, %s114
    %p121 = scmp.eq.s32.totalorder %s20, 2
    %p122 = por %p120, %p121
    %p123 = scmp.ne.s32.totalorder %s114, %s115
    %p124 = scmp.eq.s32.totalorder %s20, 0
    %p125 = por %p123, %p124
    %p126 = scmp.ne.s32.totalorder %s114, %s115
    %p127 = scmp.eq.s32.totalorder %s21, 2
    %p128 = por %p126, %p127
    %p130 = scmp.ne.s32.totalorder %s115, %s129
    %p131 = scmp.eq.s32.totalorder %s21, 0
    %p132 = por %p130, %p131
    %s134 = sadd.s32 %s133, 1
    %p137 = scmp.eq.s32.totalorder %s15, 2
    %p138 = scmp.ne.s32.totalorder %s133, %s135
    %p139 = scmp.eq.s32.totalorder %s15, 0
    %p140 = por %p138, %p139
    %p141 = scmp.ne.s32.totalorder %s133, %s135
    %p142 = scmp.eq.s32.totalorder %s20, 2
    %p143 = por %p141, %p142
    %p144 = scmp.ne.s32.totalorder %s135, %s136
    %p145 = scmp.eq.s32.totalorder %s20, 0
    %p146 = por %p144, %p145
    %p147 = scmp.ne.s32.totalorder %s135, %s136
    %p148 = scmp.eq.s32.totalorder %s21, 2
    %p149 = por %p147, %p148
    %p151 = scmp.ne.s32.totalorder %s136, %s150
    %p152 = scmp.eq.s32.totalorder %s21, 0
    %p153 = por %p151, %p152
    %s155 = sadd.s32 %s154, 1
    %p158 = scmp.eq.s32.totalorder %s15, 2
    %p159 = scmp.ne.s32.totalorder %s154, %s156
    %p160 = scmp.eq.s32.totalorder %s15, 0
    %p161 = por %p159, %p160
    %p162 = scmp.ne.s32.totalorder %s154, %s156
    %p163 = scmp.eq.s32.totalorder %s20, 2
    %p164 = por %p162, %p163
    %p165 = scmp.ne.s32.totalorder %s156, %s157
    %p166 = scmp.eq.s32.totalorder %s20, 0
    %p167 = por %p165, %p166
    %p168 = scmp.ne.s32.totalorder %s156, %s157
    %p169 = scmp.eq.s32.totalorder %s21, 2
    %p170 = por %p168, %p169
    %p172 = scmp.ne.s32.totalorder %s157, %s171
    %p173 = scmp.eq.s32.totalorder %s21, 0
    %p174 = por %p172, %p173
    %s176 = sadd.s32 %s175, 1
    %p179 = scmp.eq.s32.totalorder %s15, 2
    %p180 = scmp.ne.s32.totalorder %s175, %s177
    %p181 = scmp.eq.s32.totalorder %s15, 0
    %p182 = por %p180, %p181
    %p183 = scmp.ne.s32.totalorder %s175, %s177
    %p184 = scmp.eq.s32.totalorder %s20, 2
    %p185 = por %p183, %p184
    %p186 = scmp.ne.s32.totalorder %s177, %s178
    %p187 = scmp.eq.s32.totalorder %s20, 0
    %p188 = por %p186, %p187
    %p189 = scmp.ne.s32.totalorder %s177, %s178
    %p190 = scmp.eq.s32.totalorder %s21, 2
    %p191 = por %p189, %p190
    %p193 = scmp.ne.s32.totalorder %s178, %s192
    %p194 = scmp.eq.s32.totalorder %s21, 0
    %p195 = por %p193, %p194
    %s197 = sadd.s32 %s196, 1
    %p200 = scmp.eq.s32.totalorder %s15, 2
    %p201 = scmp.ne.s32.totalorder %s196, %s198
    %p202 = scmp.eq.s32.totalorder %s15, 0
    %p203 = por %p201, %p202
    %p204 = scmp.ne.s32.totalorder %s196, %s198
    %p205 = scmp.eq.s32.totalorder %s20, 2
    %p206 = por %p204, %p205
    %p207 = scmp.ne.s32.totalorder %s198, %s199
    %p208 = scmp.eq.s32.totalorder %s20, 0
    %p209 = por %p207, %p208
    %p210 = scmp.ne.s32.totalorder %s198, %s199
    %p211 = scmp.eq.s32.totalorder %s21, 2
    %p212 = por %p210, %p211
    %p214 = scmp.ne.s32.totalorder %s199, %s213
    %p215 = scmp.eq.s32.totalorder %s21, 0
    %p216 = por %p214, %p215
    %s217 = ssub.s32 %s15, %s22
    %p218 = scmp.eq.s32.totalorder %s217, 0
    %s220 = sadd.s32 %s219, 1
    %s221 = scalar_select %p218, %s219, %s220
    %p224 = pneg %p218
    %p225 = scmp.eq.s32.totalorder %s15, 2
    %p226 = por %p224, %p225
    %p227 = scmp.ne.s32.totalorder %s219, %s222
    %p228 = scmp.eq.s32.totalorder %s15, 0
    %p229 = por %p227, %p228
    %p230 = scmp.ne.s32.totalorder %s219, %s222
    %p231 = scmp.eq.s32.totalorder %s20, 2
    %p232 = por %p230, %p231
    %p233 = scmp.ne.s32.totalorder %s222, %s223
    %p234 = scmp.eq.s32.totalorder %s20, 0
    %p235 = por %p233, %p234
    %p236 = scmp.ne.s32.totalorder %s222, %s223
    %p237 = scmp.eq.s32.totalorder %s21, 2
    %p238 = por %p236, %p237
    %p240 = scmp.ne.s32.totalorder %s223, %s239
    %p241 = scmp.eq.s32.totalorder %s21, 0
    %p242 = por %p240, %p241
    %p243 = scmp.le.s32.totalorder 1, %s15
    %p244 = scmp.lt.s32.totalorder %s15, 4
    %p245 = pnand %p243, %p244
    %p246 = pneg %p245
    // Predicated region
    $region9: #{neural_net_forward.1} parent=5 // pred_check
      _
    $region10: #{neural_net_forward.1} parent=5 // pred_check_branch
      %248 = sbr.rel (%p245) target = $region12
    $region11: #{neural_net_forward.1} parent=5 // pred_region
      %s249 = ssub.s32 %s15, 1
      // Predicated region
      $region13: #{neural_net_forward.1} parent=11 // pred_check
        %p250 = pneg %p62
      $region14: #{neural_net_forward.1} parent=11 // pred_check_branch
        %252 = sbr.rel (%p250) target = $region16
      $region15: #{neural_net_forward.1} parent=11 // pred_region
        _
      $region16: #{neural_net_forward.1} parent=11 // pred_fallthru
        _
      // Predicated region
      $region17: #{neural_net_forward.1} parent=11 // pred_check
        %p253 = pneg %p83
      $region18: #{neural_net_forward.1} parent=11 // pred_check_branch
        %255 = sbr.rel (%p253) target = $region20
      $region19: #{neural_net_forward.1} parent=11 // pred_region
        _
      $region20: #{neural_net_forward.1} parent=11 // pred_fallthru
        _
      // Predicated region
      $region21: #{neural_net_forward.1} parent=11 // pred_check
        %p256 = pneg %p104
      $region22: #{neural_net_forward.1} parent=11 // pred_check_branch
        %258 = sbr.rel (%p256) target = $region24
      $region23: #{neural_net_forward.1} parent=11 // pred_region
        _
      $region24: #{neural_net_forward.1} parent=11 // pred_fallthru
        _
      // Predicated region
      $region25: #{neural_net_forward.1} parent=11 // pred_check
        %p259 = pneg %p125
      $region26: #{neural_net_forward.1} parent=11 // pred_check_branch
        %261 = sbr.rel (%p259) target = $region28
      $region27: #{neural_net_forward.1} parent=11 // pred_region
        _
      $region28: #{neural_net_forward.1} parent=11 // pred_fallthru
        _
      // Predicated region
      $region29: #{neural_net_forward.1} parent=11 // pred_check
        %p262 = pneg %p146
      $region30: #{neural_net_forward.1} parent=11 // pred_check_branch
        %264 = sbr.rel (%p262) target = $region32
      $region31: #{neural_net_forward.1} parent=11 // pred_region
        _
      $region32: #{neural_net_forward.1} parent=11 // pred_fallthru
        _
      // Predicated region
      $region33: #{neural_net_forward.1} parent=11 // pred_check
        %p265 = pneg %p167
      $region34: #{neural_net_forward.1} parent=11 // pred_check_branch
        %267 = sbr.rel (%p265) target = $region36
      $region35: #{neural_net_forward.1} parent=11 // pred_region
        _
      $region36: #{neural_net_forward.1} parent=11 // pred_fallthru
        _
      // Predicated region
      $region37: #{neural_net_forward.1} parent=11 // pred_check
        %p268 = pneg %p188
      $region38: #{neural_net_forward.1} parent=11 // pred_check_branch
        %270 = sbr.rel (%p268) target = $region40
      $region39: #{neural_net_forward.1} parent=11 // pred_region
        _
      $region40: #{neural_net_forward.1} parent=11 // pred_fallthru
        _
      // Predicated region
      $region41: #{neural_net_forward.1} parent=11 // pred_check
        %p271 = pneg %p209
      $region42: #{neural_net_forward.1} parent=11 // pred_check_branch
        %273 = sbr.rel (%p271) target = $region44
      $region43: #{neural_net_forward.1} parent=11 // pred_region
        _
      $region44: #{neural_net_forward.1} parent=11 // pred_fallthru
        _
    $region12: #{neural_net_forward.1} parent=5 // pred_fallthru
      _
    %p274 = scmp.lt.s32.totalorder %s15, 3
    // Predicated region
    $region45: #{neural_net_forward.1} parent=5 // pred_check
      %p275 = pneg %p274
    $region46: #{neural_net_forward.1} parent=5 // pred_check_branch
      %277 = sbr.rel (%p275) target = $region48
    $region47: #{neural_net_forward.1} parent=5 // pred_region
      // Predicated region
      $region49: #{neural_net_forward.1} parent=47 // pred_check
        %p278 = pneg %p35
      $region50: #{neural_net_forward.1} parent=47 // pred_check_branch
        %280 = sbr.rel (%p278) target = $region52
      $region51: #{neural_net_forward.1} parent=47 // pred_region
        %p281 = scmp.lt.s32.totalorder %s15, 2
        %s282 = scalar_select %p281, %s15, 2
        %s283 = smul.addr %s282, 4
        %s284 = scalar_lea.vmem %s0, %s283
      $region52: #{neural_net_forward.1} parent=47 // pred_fallthru
        _
    $region48: #{neural_net_forward.1} parent=5 // pred_fallthru
      _
    %p285 = scmp.le.s32.totalorder 1, %s15
    %p286 = scmp.lt.s32.totalorder %s15, 4
    %p287 = pnand %p285, %p286
    %p288 = pneg %p287
    // Predicated region
    $region53: #{neural_net_forward.1} parent=5 // pred_check
      _
    $region54: #{neural_net_forward.1} parent=5 // pred_check_branch
      %290 = sbr.rel (%p287) target = $region56
    $region55: #{neural_net_forward.1} parent=5 // pred_region
      %s291 = ssub.s32 %s15, 1
      %p292 = scmp.lt.s32.totalorder %s20, 2
      %s293 = scalar_select %p292, %s20, 2
      %s294 = smul.addr %s293, 4
      %s295 = scalar_lea.vmem %s0, %s294
      %p296 = pneg %p41
      %p297 = pneg %p38
      %p298 = pneg %p62
      %p299 = pneg %p59
      %p300 = pneg %p83
      %p301 = pneg %p80
      %p302 = pneg %p104
      %p303 = pneg %p101
      %p304 = pneg %p125
      %p305 = pneg %p122
      %p306 = pneg %p146
      %p307 = pneg %p143
      %p308 = pneg %p167
      %p309 = pneg %p164
      %p310 = pneg %p188
      %p311 = pneg %p185
      %p312 = pneg %p209
      %p313 = pneg %p206
      %p314 = pneg %p235
      %p315 = pneg %p232
      %p316 = scmp.lt.s32.totalorder %s20, 2
      %s317 = scalar_select %p316, %s20, 2
      %s318 = smul.addr %s317, 8
      %s319 = scalar_lea.vmem %s9, %s318
      %p320 = scmp.lt.s32.totalorder %s20, 2
      %s321 = scalar_select %p320, %s20, 2
      %s322 = smul.addr %s321, 4
      %s323 = scalar_lea.vmem %s0, %s322
      %p324 = scmp.lt.s32.totalorder %s20, 2
      %s325 = scalar_select %p324, %s20, 2
      %s326 = smul.addr %s325, 8
      %s327 = scalar_lea.vmem %s9, %s326
      %v329 = vld [vmem:[%s323] sm:$0xf]
      %v330 = vld [vmem:[%s1] sm:$0xf]
      %v331 = vld [vmem:[%s1 + $0x4] sm:$0xf]
      %v332 = vld [vmem:[%s1 + $0x8] sm:$0xf]
      %v333 = vld [vmem:[%s1 + $0xc] sm:$0xf]
      %v334 = vld [vmem:[%s1 + $0x10] sm:$0xf]
      %v335 = vld [vmem:[%s1 + $0x14] sm:$0xf]
      %v336 = vld [vmem:[%s1 + $0x18] sm:$0xf]
      %v337 = vld [vmem:[%s1 + $0x1c] sm:$0xf]
      %v338 = vld [vmem:[%s1 + $0x20] sm:$0xf]
      %v339 = vld [vmem:[%s1 + $0x24] sm:$0xf]
      %v340 = vld [vmem:[%s1 + $0x28] sm:$0xf]
      %v341 = vld [vmem:[%s1 + $0x2c] sm:$0xf]
      %v342 = vld [vmem:[%s1 + $0x30] sm:$0xf]
      %v343 = vld [vmem:[%s1 + $0x34] sm:$0xf]
      %v344 = vld [vmem:[%s1 + $0x38] sm:$0xf]
      %v345 = vld [vmem:[%s1 + $0x3c] sm:$0xf]
      %v346 = vld [vmem:[%s2] sm:$0x1]
      %v348 = vlaneseq
      %v349 = vshrl.u32 %v348, 7
      %v350 = vsub.s32 0, %v349
      %v351 = vrot.slane %v346, %v350
      %v369 = vunpack.c.l.b16 %v330
      %v370 = vunpack.c.l.b16 %v331
      %v371 = vunpack.c.l.b16 %v332
      %v372 = vunpack.c.l.b16 %v333
      %v373 = vunpack.c.l.b16 %v334
      %v374 = vunpack.c.l.b16 %v335
      %v375 = vunpack.c.l.b16 %v336
      %v376 = vunpack.c.l.b16 %v337
      %v377 = vunpack.c.l.b16 %v338
      %v378 = vunpack.c.l.b16 %v339
      %v379 = vunpack.c.l.b16 %v340
      %v380 = vunpack.c.l.b16 %v341
      %v381 = vunpack.c.l.b16 %v342
      %v382 = vunpack.c.l.b16 %v343
      %v383 = vunpack.c.l.b16 %v344
      %v384 = vunpack.c.l.b16 %v345
      %v385 = vpack.c.b16 %v370, %v369
      %v386 = vpack.c.b16 %v372, %v371
      %v387 = vpack.c.b16 %v374, %v373
      %v388 = vpack.c.b16 %v376, %v375
      %v389 = vpack.c.b16 %v378, %v377
      %v390 = vpack.c.b16 %v380, %v379
      %v391 = vpack.c.b16 %v382, %v381
      %v392 = vpack.c.b16 %v384, %v383
      %401 = vmatprep.subr.bf16.mxu0 0
      %402 = vmatpush1.bf16.msra.mxu0 %v385
      %403 = vmatprep.subr.bf16.mxu0 0
      %404 = vmatpush1.bf16.msra.mxu0 %v386
      %405 = vmatprep.subr.bf16.mxu0 0
      %406 = vmatpush1.bf16.msra.mxu0 %v387
      %407 = vmatprep.subr.bf16.mxu0 0
      %408 = vmatpush1.bf16.msra.mxu0 %v388
      %409 = vmatprep.subr.bf16.mxu0 0
      %410 = vmatpush1.bf16.msra.mxu0 %v389
      %411 = vmatprep.subr.bf16.mxu0 0
      %412 = vmatpush1.bf16.msra.mxu0 %v390
      %413 = vmatprep.subr.bf16.mxu0 0
      %414 = vmatpush1.bf16.msra.mxu0 %v391
      %415 = vmatprep.subr.bf16.mxu0 0
      %416 = vmatpush1.bf16.msra.mxu0 %v392
      %417 = vmatprep.subr.bf16.mxu0 0
      %418 = vmatpush1.bf16.msra.mxu0 0
      %419 = vmatprep.subr.bf16.mxu0 0
      %420 = vmatpush1.bf16.msra.mxu0 0
      %421 = vmatprep.subr.bf16.mxu0 0
      %422 = vmatpush1.bf16.msra.mxu0 0
      %423 = vmatprep.subr.bf16.mxu0 0
      %424 = vmatpush1.bf16.msra.mxu0 0
      %425 = vmatprep.subr.bf16.mxu0 0
      %426 = vmatpush1.bf16.msra.mxu0 0
      %427 = vmatprep.subr.bf16.mxu0 0
      %428 = vmatpush1.bf16.msra.mxu0 0
      %429 = vmatprep.subr.bf16.mxu0 0
      %430 = vmatpush1.bf16.msra.mxu0 0
      %431 = vmatprep.subr.bf16.mxu0 0
      %432 = vmatpush1.bf16.msra.mxu0 0
      %433 = vmatprep.mubr.bf16.mxu0 0
      %434 = vmatmul.mubr.bf16.gmra.mrb[0].mxu0 %v329
      %v435 = vpop.f32.mrb[0].mxu0
      %v436 = vadd.f32 %v351, %v435
      %v437 = vpop.f32.mrb[0].mxu0
      %v438 = vpop.f32.mrb[0].mxu0
      %v439 = vpop.f32.mrb[0].mxu0
      %440 = vdwg.mxu0
      %v441 = vmax.f32 %v436, -1.0
      %v442 = vmin.f32 %v441, 1.0
      %v443 = vpack.c.bf16 %v442, %v442
      %v444 = vld [vmem:[%s3] sm:$0xf]
      %v445 = vld [vmem:[%s3 + $0x4] sm:$0xf]
      %v446 = vld [vmem:[%s3 + $0x8] sm:$0xf]
      %v447 = vld [vmem:[%s3 + $0xc] sm:$0xf]
      %v448 = vld [vmem:[%s3 + $0x10] sm:$0xf]
      %v449 = vld [vmem:[%s3 + $0x14] sm:$0xf]
      %v450 = vld [vmem:[%s3 + $0x18] sm:$0xf]
      %v451 = vld [vmem:[%s3 + $0x1c] sm:$0xf]
      %v452 = vld [vmem:[%s3 + $0x20] sm:$0xf]
      %v453 = vld [vmem:[%s3 + $0x24] sm:$0xf]
      %v454 = vld [vmem:[%s3 + $0x28] sm:$0xf]
      %v455 = vld [vmem:[%s3 + $0x2c] sm:$0xf]
      %v456 = vld [vmem:[%s3 + $0x30] sm:$0xf]
      %v457 = vld [vmem:[%s3 + $0x34] sm:$0xf]
      %v458 = vld [vmem:[%s3 + $0x38] sm:$0xf]
      %v459 = vld [vmem:[%s3 + $0x3c] sm:$0xf]
      %v460 = vld [vmem:[%s4] sm:$0x1]
      %v462 = vlaneseq
      %v463 = vshrl.u32 %v462, 7
      %v464 = vsub.s32 0, %v463
      %v465 = vrot.slane %v460, %v464
      %v483 = vunpack.c.l.b16 %v444
      %v484 = vunpack.c.l.b16 %v445
      %v485 = vunpack.c.l.b16 %v446
      %v486 = vunpack.c.l.b16 %v447
      %v487 = vunpack.c.l.b16 %v448
      %v488 = vunpack.c.l.b16 %v449
      %v489 = vunpack.c.l.b16 %v450
      %v490 = vunpack.c.l.b16 %v451
      %v491 = vunpack.c.l.b16 %v452
      %v492 = vunpack.c.l.b16 %v453
      %v493 = vunpack.c.l.b16 %v454
      %v494 = vunpack.c.l.b16 %v455
      %v495 = vunpack.c.l.b16 %v456
      %v496 = vunpack.c.l.b16 %v457
      %v497 = vunpack.c.l.b16 %v458
      %v498 = vunpack.c.l.b16 %v459
      %v499 = vpack.c.b16 %v484, %v483
      %v500 = vpack.c.b16 %v486, %v485
      %v501 = vpack.c.b16 %v488, %v487
      %v502 = vpack.c.b16 %v490, %v489
      %v503 = vpack.c.b16 %v492, %v491
      %v504 = vpack.c.b16 %v494, %v493
      %v505 = vpack.c.b16 %v496, %v495
      %v506 = vpack.c.b16 %v498, %v497
      %515 = vmatprep.subr.bf16.mxu0 0
      %516 = vmatpush1.bf16.msra.mxu0 %v499
      %517 = vmatprep.subr.bf16.mxu0 0
      %518 = vmatpush1.bf16.msra.mxu0 %v500
      %519 = vmatprep.subr.bf16.mxu0 0
      %520 = vmatpush1.bf16.msra.mxu0 %v501
      %521 = vmatprep.subr.bf16.mxu0 0
      %522 = vmatpush1.bf16.msra.mxu0 %v502
      %523 = vmatprep.subr.bf16.mxu0 0
      %524 = vmatpush1.bf16.msra.mxu0 %v503
      %525 = vmatprep.subr.bf16.mxu0 0
      %526 = vmatpush1.bf16.msra.mxu0 %v504
      %527 = vmatprep.subr.bf16.mxu0 0
      %528 = vmatpush1.bf16.msra.mxu0 %v505
      %529 = vmatprep.subr.bf16.mxu0 0
      %530 = vmatpush1.bf16.msra.mxu0 %v506
      %531 = vmatprep.subr.bf16.mxu0 0
      %532 = vmatpush1.bf16.msra.mxu0 0
      %533 = vmatprep.subr.bf16.mxu0 0
      %534 = vmatpush1.bf16.msra.mxu0 0
      %535 = vmatprep.subr.bf16.mxu0 0
      %536 = vmatpush1.bf16.msra.mxu0 0
      %537 = vmatprep.subr.bf16.mxu0 0
      %538 = vmatpush1.bf16.msra.mxu0 0
      %539 = vmatprep.subr.bf16.mxu0 0
      %540 = vmatpush1.bf16.msra.mxu0 0
      %541 = vmatprep.subr.bf16.mxu0 0
      %542 = vmatpush1.bf16.msra.mxu0 0
      %543 = vmatprep.subr.bf16.mxu0 0
      %544 = vmatpush1.bf16.msra.mxu0 0
      %545 = vmatprep.subr.bf16.mxu0 0
      %546 = vmatpush1.bf16.msra.mxu0 0
      %547 = vmatprep.mubr.bf16.mxu0 0
      %548 = vmatmul.mubr.bf16.gmra.mrb[0].mxu0 %v443
      %v549 = vpop.f32.mrb[0].mxu0
      %v550 = vadd.f32 %v465, %v549
      %v551 = vpop.f32.mrb[0].mxu0
      %v552 = vpop.f32.mrb[0].mxu0
      %v553 = vpop.f32.mrb[0].mxu0
      %554 = vdwg.mxu0
      %v555 = vmax.f32 %v550, -1.0
      %v556 = vmin.f32 %v555, 1.0
      %v557 = vpack.c.bf16 %v556, %v556
      %v558 = vld [vmem:[%s5] sm:$0xf]
      %v559 = vld [vmem:[%s5 + $0x4] sm:$0xf]
      %v560 = vld [vmem:[%s5 + $0x8] sm:$0xf]
      %v561 = vld [vmem:[%s5 + $0xc] sm:$0xf]
      %v562 = vld [vmem:[%s5 + $0x10] sm:$0xf]
      %v563 = vld [vmem:[%s5 + $0x14] sm:$0xf]
      %v564 = vld [vmem:[%s5 + $0x18] sm:$0xf]
      %v565 = vld [vmem:[%s5 + $0x1c] sm:$0xf]
      %v566 = vld [vmem:[%s5 + $0x20] sm:$0xf]
      %v567 = vld [vmem:[%s5 + $0x24] sm:$0xf]
      %v568 = vld [vmem:[%s5 + $0x28] sm:$0xf]
      %v569 = vld [vmem:[%s5 + $0x2c] sm:$0xf]
      %v570 = vld [vmem:[%s5 + $0x30] sm:$0xf]
      %v571 = vld [vmem:[%s5 + $0x34] sm:$0xf]
      %v572 = vld [vmem:[%s5 + $0x38] sm:$0xf]
      %v573 = vld [vmem:[%s5 + $0x3c] sm:$0xf]
      %v574 = vld [vmem:[%s6] sm:$0x1]
      %v576 = vlaneseq
      %v577 = vshrl.u32 %v576, 7
      %v578 = vsub.s32 0, %v577
      %v579 = vrot.slane %v574, %v578
      %v597 = vunpack.c.l.b16 %v558
      %v598 = vunpack.c.l.b16 %v559
      %v599 = vunpack.c.l.b16 %v560
      %v600 = vunpack.c.l.b16 %v561
      %v601 = vunpack.c.l.b16 %v562
      %v602 = vunpack.c.l.b16 %v563
      %v603 = vunpack.c.l.b16 %v564
      %v604 = vunpack.c.l.b16 %v565
      %v605 = vunpack.c.l.b16 %v566
      %v606 = vunpack.c.l.b16 %v567
      %v607 = vunpack.c.l.b16 %v568
      %v608 = vunpack.c.l.b16 %v569
      %v609 = vunpack.c.l.b16 %v570
      %v610 = vunpack.c.l.b16 %v571
      %v611 = vunpack.c.l.b16 %v572
      %v612 = vunpack.c.l.b16 %v573
      %v613 = vpack.c.b16 %v598, %v597
      %v614 = vpack.c.b16 %v600, %v599
      %v615 = vpack.c.b16 %v602, %v601
      %v616 = vpack.c.b16 %v604, %v603
      %v617 = vpack.c.b16 %v606, %v605
      %v618 = vpack.c.b16 %v608, %v607
      %v619 = vpack.c.b16 %v610, %v609
      %v620 = vpack.c.b16 %v612, %v611
      %629 = vmatprep.subr.bf16.mxu0 0
      %630 = vmatpush1.bf16.msra.mxu0 %v613
      %631 = vmatprep.subr.bf16.mxu0 0
      %632 = vmatpush1.bf16.msra.mxu0 %v614
      %633 = vmatprep.subr.bf16.mxu0 0
      %634 = vmatpush1.bf16.msra.mxu0 %v615
      %635 = vmatprep.subr.bf16.mxu0 0
      %636 = vmatpush1.bf16.msra.mxu0 %v616
      %637 = vmatprep.subr.bf16.mxu0 0
      %638 = vmatpush1.bf16.msra.mxu0 %v617
      %639 = vmatprep.subr.bf16.mxu0 0
      %640 = vmatpush1.bf16.msra.mxu0 %v618
      %641 = vmatprep.subr.bf16.mxu0 0
      %642 = vmatpush1.bf16.msra.mxu0 %v619
      %643 = vmatprep.subr.bf16.mxu0 0
      %644 = vmatpush1.bf16.msra.mxu0 %v620
      %645 = vmatprep.subr.bf16.mxu0 0
      %646 = vmatpush1.bf16.msra.mxu0 0
      %647 = vmatprep.subr.bf16.mxu0 0
      %648 = vmatpush1.bf16.msra.mxu0 0
      %649 = vmatprep.subr.bf16.mxu0 0
      %650 = vmatpush1.bf16.msra.mxu0 0
      %651 = vmatprep.subr.bf16.mxu0 0
      %652 = vmatpush1.bf16.msra.mxu0 0
      %653 = vmatprep.subr.bf16.mxu0 0
      %654 = vmatpush1.bf16.msra.mxu0 0
      %655 = vmatprep.subr.bf16.mxu0 0
      %656 = vmatpush1.bf16.msra.mxu0 0
      %657 = vmatprep.subr.bf16.mxu0 0
      %658 = vmatpush1.bf16.msra.mxu0 0
      %659 = vmatprep.subr.bf16.mxu0 0
      %660 = vmatpush1.bf16.msra.mxu0 0
      %661 = vmatprep.mubr.bf16.mxu0 0
      %662 = vmatmul.mubr.bf16.gmra.mrb[0].mxu0 %v557
      %v663 = vpop.f32.mrb[0].mxu0
      %v664 = vadd.f32 %v579, %v663
      %v665 = vpop.f32.mrb[0].mxu0
      %v666 = vpop.f32.mrb[0].mxu0
      %v667 = vpop.f32.mrb[0].mxu0
      %668 = vdwg.mxu0
      %v669 = vmax.f32 %v664, -1.0
      %v670 = vmin.f32 %v669, 1.0
      %v671 = vpack.c.bf16 %v670, %v670
      %v672 = vld [vmem:[%s7] sm:$0xf]
      %v673 = vld [vmem:[%s7 + $0x4] sm:$0xf]
      %v674 = vld [vmem:[%s7 + $0x8] sm:$0xf]
      %v675 = vld [vmem:[%s7 + $0xc] sm:$0xf]
      %v676 = vld [vmem:[%s7 + $0x10] sm:$0xf]
      %v677 = vld [vmem:[%s7 + $0x14] sm:$0xf]
      %v678 = vld [vmem:[%s7 + $0x18] sm:$0xf]
      %v679 = vld [vmem:[%s7 + $0x1c] sm:$0xf]
      %v680 = vld [vmem:[%s7 + $0x20] sm:$0xf]
      %v681 = vld [vmem:[%s7 + $0x24] sm:$0xf]
      %v682 = vld [vmem:[%s7 + $0x28] sm:$0xf]
      %v683 = vld [vmem:[%s7 + $0x2c] sm:$0xf]
      %v684 = vld [vmem:[%s7 + $0x30] sm:$0xf]
      %v685 = vld [vmem:[%s7 + $0x34] sm:$0xf]
      %v686 = vld [vmem:[%s7 + $0x38] sm:$0xf]
      %v687 = vld [vmem:[%s7 + $0x3c] sm:$0xf]
      %v688 = vld [vmem:[%s8] sm:$0x1]
      %v690 = vlaneseq
      %v691 = vshrl.u32 %v690, 7
      %v692 = vsub.s32 0, %v691
      %v693 = vrot.slane %v688, %v692
      %v711 = vunpack.c.l.b16 %v672
      %v712 = vunpack.c.l.b16 %v673
      %v713 = vunpack.c.l.b16 %v674
      %v714 = vunpack.c.l.b16 %v675
      %v715 = vunpack.c.l.b16 %v676
      %v716 = vunpack.c.l.b16 %v677
      %v717 = vunpack.c.l.b16 %v678
      %v718 = vunpack.c.l.b16 %v679
      %v719 = vunpack.c.l.b16 %v680
      %v720 = vunpack.c.l.b16 %v681
      %v721 = vunpack.c.l.b16 %v682
      %v722 = vunpack.c.l.b16 %v683
      %v723 = vunpack.c.l.b16 %v684
      %v724 = vunpack.c.l.b16 %v685
      %v725 = vunpack.c.l.b16 %v686
      %v726 = vunpack.c.l.b16 %v687
      %v727 = vpack.c.b16 %v712, %v711
      %v728 = vpack.c.b16 %v714, %v713
      %v729 = vpack.c.b16 %v716, %v715
      %v730 = vpack.c.b16 %v718, %v717
      %v731 = vpack.c.b16 %v720, %v719
      %v732 = vpack.c.b16 %v722, %v721
      %v733 = vpack.c.b16 %v724, %v723
      %v734 = vpack.c.b16 %v726, %v725
      %743 = vmatprep.subr.bf16.mxu0 0
      %744 = vmatpush1.bf16.msra.mxu0 %v727
      %745 = vmatprep.subr.bf16.mxu0 0
      %746 = vmatpush1.bf16.msra.mxu0 %v728
      %747 = vmatprep.subr.bf16.mxu0 0
      %748 = vmatpush1.bf16.msra.mxu0 %v729
      %749 = vmatprep.subr.bf16.mxu0 0
      %750 = vmatpush1.bf16.msra.mxu0 %v730
      %751 = vmatprep.subr.bf16.mxu0 0
      %752 = vmatpush1.bf16.msra.mxu0 %v731
      %753 = vmatprep.subr.bf16.mxu0 0
      %754 = vmatpush1.bf16.msra.mxu0 %v732
      %755 = vmatprep.subr.bf16.mxu0 0
      %756 = vmatpush1.bf16.msra.mxu0 %v733
      %757 = vmatprep.subr.bf16.mxu0 0
      %758 = vmatpush1.bf16.msra.mxu0 %v734
      %759 = vmatprep.subr.bf16.mxu0 0
      %760 = vmatpush1.bf16.msra.mxu0 0
      %761 = vmatprep.subr.bf16.mxu0 0
      %762 = vmatpush1.bf16.msra.mxu0 0
      %763 = vmatprep.subr.bf16.mxu0 0
      %764 = vmatpush1.bf16.msra.mxu0 0
      %765 = vmatprep.subr.bf16.mxu0 0
      %766 = vmatpush1.bf16.msra.mxu0 0
      %767 = vmatprep.subr.bf16.mxu0 0
      %768 = vmatpush1.bf16.msra.mxu0 0
      %769 = vmatprep.subr.bf16.mxu0 0
      %770 = vmatpush1.bf16.msra.mxu0 0
      %771 = vmatprep.subr.bf16.mxu0 0
      %772 = vmatpush1.bf16.msra.mxu0 0
      %773 = vmatprep.subr.bf16.mxu0 0
      %774 = vmatpush1.bf16.msra.mxu0 0
      %775 = vmatprep.mubr.bf16.mxu0 0
      %776 = vmatmul.mubr.bf16.gmra.mrb[0].mxu0 %v671
      %v777 = vpop.f32.mrb[0].mxu0
      %v778 = vadd.f32 %v693, %v777
      %v779 = vpop.f32.mrb[0].mxu0
      %v780 = vpop.f32.mrb[0].mxu0
      %v781 = vpop.f32.mrb[0].mxu0
      %782 = vdwg.mxu0
      %783 = vst [vmem:[%s327] sm:$0xff] %v778
      %p784 = scmp.lt.s32.totalorder %s20, 2
      %s785 = scalar_select %p784, %s20, 2
      %s786 = smul.addr %s785, 8
      %s787 = scalar_lea.vmem %s9, %s786
      // Predicated region
      $region57: #{neural_net_forward.1} parent=55 // pred_check
        %p788 = pneg %p232
      $region58: #{neural_net_forward.1} parent=55 // pred_check_branch
        %790 = sbr.rel (%p788) target = $region60
      $region59: #{neural_net_forward.1} parent=55 // pred_region
        _
      $region60: #{neural_net_forward.1} parent=55 // pred_fallthru
        _
    $region56: #{neural_net_forward.1} parent=5 // pred_fallthru
      _
    %p791 = scmp.le.s32.totalorder 2, %s15
    // Predicated region
    $region61: #{neural_net_forward.1} parent=5 // pred_check
      %p792 = pneg %p791
    $region62: #{neural_net_forward.1} parent=5 // pred_check_branch
      %794 = sbr.rel (%p792) target = $region64
    $region63: #{neural_net_forward.1} parent=5 // pred_region
      %s795 = ssub.s32 %s15, 2
      // Predicated region
      $region65: #{neural_net_forward.1} parent=63 // pred_check
        %p796 = pneg %p238
      $region66: #{neural_net_forward.1} parent=63 // pred_check_branch
        %798 = sbr.rel (%p796) target = $region68
      $region67: #{neural_net_forward.1} parent=63 // pred_region
        %p799 = scmp.lt.s32.totalorder %s21, 2
        %s800 = scalar_select %p799, %s21, 2
        %s801 = smul.addr %s800, 8
        %s802 = scalar_lea.vmem %s9, %s801
      $region68: #{neural_net_forward.1} parent=63 // pred_fallthru
        _
    $region64: #{neural_net_forward.1} parent=5 // pred_fallthru
      _
  $region6: #{neural_net_forward.1} parent=0 // loop_footer
    %s19 = sadd.s32 1, %s15
  $region7: #{neural_net_forward.1} parent=0 // loop_footer_branch
    %14 = sbr.rel target = $region3
  $region8: #{neural_net_forward.1} parent=0 // loop_exit
    _

</llo_original>
